<compile_context>
chip_gen: v7x
topology: tpu7x:2x2x1
jax: 0.10.0
libtpu: 0.0.40
codegen_flags: <defaults>
</compile_context>

<pallas_src>
import functools

import jax
import jax.numpy as jnp
from jax import lax
from jax.experimental import pallas as pl
from jax.experimental.pallas import tpu as pltpu

EPS = 1e-5  # torch.nn.GroupNorm default


def _shift_flat(y, d, hw):
    """shifted[:, f] = y[:, f + d] if 0 <= f + d < hw else 0 (d is a static int)."""
    if d == 0:
        return y
    c = y.shape[0]
    pad = jnp.zeros((c, abs(d)), jnp.float32)
    if d > 0:
        return jnp.concatenate([y[:, d:], pad], axis=1)
    return jnp.concatenate([pad, y[:, :hw + d]], axis=1)


def _group_aggregate(s, cpg):
    """Sum a (C, 1) per-channel statistic over groups of cpg consecutive channels
    and broadcast the group value back to every channel (returns (C, 1))."""
    if cpg == 1:
        return s  # groups == channels (the C=4 case): nothing to aggregate
    c = s.shape[0]
    gi = lax.broadcasted_iota(jnp.int32, (c, c), 0) // cpg
    gj = lax.broadcasted_iota(jnp.int32, (c, c), 1) // cpg
    same = (gi == gj).astype(jnp.float32)
    return jnp.dot(same, s, preferred_element_type=jnp.float32)


def _group_norm_relu(x, gamma, beta, groups):
    """GroupNorm (two-pass, biased variance, eps=1e-5) + ReLU on a (C, HW) tile."""
    c, hw = x.shape
    cpg = c // groups
    inv_n = 1.0 / float(hw * cpg)
    mean = _group_aggregate(jnp.sum(x, axis=1, keepdims=True), cpg) * inv_n   # (C,1)
    xc = x - mean                                   # two-pass: no E[x^2]-E[x]^2 cancellation
    var = _group_aggregate(jnp.sum(xc * xc, axis=1, keepdims=True), cpg) * inv_n
    y = xc * lax.rsqrt(var + EPS) * gamma + beta
    return jnp.maximum(y, 0.0)


def _conv3x3_im2col(y, w_ref, H, W, not_first_col, not_last_col, mm_dtype):
    """3x3 'same' conv on a (Cin, HW) tile as a single MXU matmul.

    w_ref: (Cout, 9*Cin) pre-stacked weights; column index k*Cin + ci with
    k = ky*3 + kx.  Each tap is a zero-padded shift of the flattened plane
    along the lane axis (the pad handles the H boundary, the column masks the
    W boundary); the 9 shifted planes are stacked along sublanes into a
    (9*Cin, HW) im2col tile and fed to one (Cout, 9*Cin) @ (9*Cin, HW) matmul
    whose output stays lane-dense.
    """
    hw = H * W
    taps = []
    for k in range(9):                          # static unroll over the 3x3 taps
        dy, dx = k // 3 - 1, k % 3 - 1
        t = _shift_flat(y, dy * W + dx, hw)
        if dx == -1:
            t = t * not_first_col
        elif dx == 1:
            t = t * not_last_col
        taps.append(t)
    patches = jnp.concatenate(taps, axis=0).astype(mm_dtype)   # (9*Cin, HW)
    return jnp.dot(w_ref[...].astype(mm_dtype), patches,
                   preferred_element_type=jnp.float32)


def _resblock_kernel(x_ref, g1_ref, b1_ref, w1_ref, g2_ref, b2_ref, w2_ref,
                     out_ref, *, H, W, groups1, groups2, mm_dtype):
    hw = H * W
    # W-boundary masks for the +/-1 column shifts, built once per grid step.
    col = lax.broadcasted_iota(jnp.int32, (1, hw), 1) % W
    not_first_col = (col > 0).astype(jnp.float32)       # valid where w >= 1
    not_last_col = (col < W - 1).astype(jnp.float32)    # valid where w <= W-2

    h = _group_norm_relu(x_ref[0], g1_ref[...], b1_ref[...], groups1)            # norm1 + relu
    h = _conv3x3_im2col(h, w1_ref, H, W, not_first_col, not_last_col, mm_dtype)  # conv1
    h = _group_norm_relu(h, g2_ref[...], b2_ref[...], groups2)                   # norm2 + relu
    h = _conv3x3_im2col(h, w2_ref, H, W, not_first_col, not_last_col, mm_dtype)  # conv2

    # Identity shortcut (downsample=None); x re-read here so it is not kept
    # live across both convs.
    out_ref[0] = h + x_ref[0]


def resblock_forward(x_nchw, params, *, matmul_dtype=jnp.float32):
    """matmul_dtype=jnp.bfloat16 enables the fast MXU path for large-C configs
    (GN statistics / accumulation stay f32); default f32 keeps <1e-3 accuracy."""
    g1, b1, w1 = params["g1"], params["b1"], params["w1"]
    g2, b2, w2 = params["g2"], params["b2"], params["w2"]
    N, cin, H, W = x_nchw.shape
    cout = w1.shape[0]
    assert cin == cout, "identity shortcut requires inplanes == planes"
    groups1, groups2 = min(32, cin), min(32, cout)
    assert cin % groups1 == 0 and cout % groups2 == 0, "GroupNorm needs C % groups == 0"
    hw = H * W

    # NCHW -> (N, C, H*W): pure reshape (no transpose); spatial dim -> lane axis.
    x = x_nchw.reshape(N, cin, hw).astype(jnp.float32)
    # OIHW -> (Cout, ky, kx, Cin) -> (Cout, 9*Cin): column index (ky*3+kx)*Cin + ci,
    # matching the kernel's sublane-stacked im2col tile.
    w1k = jnp.transpose(w1, (0, 2, 3, 1)).reshape(cout, 9 * cin).astype(jnp.float32)
    w2k = jnp.transpose(w2, (0, 2, 3, 1)).reshape(cout, 9 * cout).astype(jnp.float32)
    g1r = g1.reshape(cin, 1).astype(jnp.float32)
    b1r = b1.reshape(cin, 1).astype(jnp.float32)
    g2r = g2.reshape(cout, 1).astype(jnp.float32)
    b2r = b2.reshape(cout, 1).astype(jnp.float32)

    kernel = functools.partial(_resblock_kernel, H=H, W=W,
                               groups1=groups1, groups2=groups2,
                               mm_dtype=matmul_dtype)

    flops = 4 * N * hw * 9 * cin * cout                 # two 3x3 convs, 2 flops/MAC
    bytes_accessed = 4 * (2 * N * cin * hw              # input + output
                          + 2 * 9 * cin * cout          # both conv weights
                          + 2 * (cin + cout))           # GN affine params

    out = pl.pallas_call(
        kernel,
        out_shape=jax.ShapeDtypeStruct((N, cout, hw), jnp.float32),
        grid_spec=pltpu.PrefetchScalarGridSpec(
            num_scalar_prefetch=0,
            grid=(N,),
            in_specs=[
                pl.BlockSpec((1, cin, hw), lambda b: (b, 0, 0)),
                pl.BlockSpec((cin, 1), lambda b: (0, 0)),
                pl.BlockSpec((cin, 1), lambda b: (0, 0)),
                pl.BlockSpec((cout, 9 * cin), lambda b: (0, 0)),
                pl.BlockSpec((cout, 1), lambda b: (0, 0)),
                pl.BlockSpec((cout, 1), lambda b: (0, 0)),
                pl.BlockSpec((cout, 9 * cout), lambda b: (0, 0)),
            ],
            out_specs=pl.BlockSpec((1, cout, hw), lambda b: (b, 0, 0)),
        ),
        compiler_params=pltpu.CompilerParams(dimension_semantics=("parallel",)),
        cost_estimate=pl.CostEstimate(flops=flops,
                                      transcendentals=N * (cin + cout),
                                      bytes_accessed=bytes_accessed),
    )(x, g1r, b1r, w1k, g2r, b2r, w2k)

    # TODO(synk): add a spatial (row-halo) grid axis for ResNet-scale H*W / v7x
    # VMEM budgets; unnecessary at 16x16 where the whole plane is 2 vregs wide.
    return out.reshape(N, cout, H, W)


def ref_resblock(x, params):
    """Pure-JAX reference (NCHW, matches the PyTorch module)."""
    def gn(v, gamma, beta, groups):
        n, c, h, w = v.shape
        vg = v.reshape(n, groups, c // groups, h, w)
        mean = vg.mean(axis=(2, 3, 4), keepdims=True)
        var = vg.var(axis=(2, 3, 4), keepdims=True)
        vn = ((vg - mean) / jnp.sqrt(var + EPS)).reshape(n, c, h, w)
        return vn * gamma.reshape(1, c, 1, 1) + beta.reshape(1, c, 1, 1)

    def conv(v, w):
        return lax.conv_general_dilated(v, w, (1, 1), ((1, 1), (1, 1)),
                                        dimension_numbers=("NCHW", "OIHW", "NCHW"))

    h = jax.nn.relu(gn(x, params["g1"], params["b1"], min(32, x.shape[1])))
    h = conv(h, params["w1"])
    h = jax.nn.relu(gn(h, params["g2"], params["b2"], min(32, h.shape[1])))
    h = conv(h, params["w2"])
    return h + x


if __name__ == "__main__":
    N, C, H, W = 2, 4, 16, 16        # inplanes = planes = 4, stride = 1, no downsample
    planes = C
    ks = jax.random.split(jax.random.PRNGKey(0), 7)
    x = jax.random.normal(ks[0], (N, C, H, W), jnp.float32)
    params = dict(
        g1=1.0 + 0.1 * jax.random.normal(ks[1], (C,), jnp.float32),
        b1=0.1 * jax.random.normal(ks[2], (C,), jnp.float32),
        w1=0.2 * jax.random.normal(ks[3], (planes, C, 3, 3), jnp.float32),
        g2=1.0 + 0.1 * jax.random.normal(ks[4], (planes,), jnp.float32),
        b2=0.1 * jax.random.normal(ks[5], (planes,), jnp.float32),
        w2=0.2 * jax.random.normal(ks[6], (planes, planes, 3, 3), jnp.float32),
    )

    out = jax.block_until_ready(resblock_forward(x, params))
    ref = jax.block_until_ready(ref_resblock(x, params))
    err = float(jnp.max(jnp.abs(out - ref)))
    assert out.shape == (N, planes, H, W), out.shape
    assert err < 1e-3, f"max abs err {err}"
    print("KERNEL_OK")
</pallas_src>

<mosaic_0001>
module attributes {stable_mosaic.version = 11 : i64} {
  func.func @_resblock_kernel(%arg0: i32, %arg1: memref<1x4x256xf32, #tpu.memory_space<vmem>>, %arg2: memref<4x1xf32, #tpu.memory_space<vmem>>, %arg3: memref<4x1xf32, #tpu.memory_space<vmem>>, %arg4: memref<4x36xf32, #tpu.memory_space<vmem>>, %arg5: memref<4x1xf32, #tpu.memory_space<vmem>>, %arg6: memref<4x1xf32, #tpu.memory_space<vmem>>, %arg7: memref<4x36xf32, #tpu.memory_space<vmem>>, %arg8: memref<1x4x256xf32, #tpu.memory_space<vmem>>) attributes {dimension_semantics = [#tpu.dimension_semantics<parallel>], iteration_bounds = array<i64: 2>, scalar_prefetch = 0 : i64, scratch_operands = 0 : i64, tpu.core_type = #tpu.core_type<tc>, window_params = [{transform_indices = @transform_0, window_bounds = array<i64: 1, 4, 256>}, {pipeline_mode = #tpu.pipeline_mode<synchronous>, transform_indices = @transform_1, window_bounds = array<i64: 4, 1>}, {pipeline_mode = #tpu.pipeline_mode<synchronous>, transform_indices = @transform_2, window_bounds = array<i64: 4, 1>}, {pipeline_mode = #tpu.pipeline_mode<synchronous>, transform_indices = @transform_3, window_bounds = array<i64: 4, 36>}, {pipeline_mode = #tpu.pipeline_mode<synchronous>, transform_indices = @transform_4, window_bounds = array<i64: 4, 1>}, {pipeline_mode = #tpu.pipeline_mode<synchronous>, transform_indices = @transform_5, window_bounds = array<i64: 4, 1>}, {pipeline_mode = #tpu.pipeline_mode<synchronous>, transform_indices = @transform_6, window_bounds = array<i64: 4, 36>}, {transform_indices = @transform_7, window_bounds = array<i64: 1, 4, 256>}]} {
    %0 = tpu.iota {dimensions = array<i32: 1>} : vector<1x256xi32>
    %c16_i32 = arith.constant 16 : i32
    %c0_i32 = arith.constant 0 : i32
    %1 = arith.cmpi eq, %c16_i32, %c0_i32 : i32
    %c1_i32 = arith.constant 1 : i32
    %2 = arith.select %1, %c1_i32, %c16_i32 : i32
    %3 = vector.broadcast %2 : i32 to vector<1x256xi32>
    %4 = arith.remsi %0, %3 : vector<1x256xi32>
    %c0_i32_0 = arith.constant 0 : i32
    %5 = vector.broadcast %c0_i32_0 : i32 to vector<1x256xi32>
    %6 = arith.cmpi ne, %4, %5 : vector<1x256xi32>
    %c0_i32_1 = arith.constant 0 : i32
    %7 = vector.broadcast %c0_i32_1 : i32 to vector<1x256xi32>
    %8 = arith.cmpi slt, %4, %7 : vector<1x256xi32>
    %c0_i32_2 = arith.constant 0 : i32
    %9 = arith.cmpi slt, %2, %c0_i32_2 : i32
    %10 = vector.broadcast %9 : i1 to vector<1x256xi1>
    %11 = vector.broadcast %10 : vector<1x256xi1> to vector<1x256xi1>
    %12 = arith.xori %8, %11 : vector<1x256xi1>
    %13 = arith.andi %12, %6 : vector<1x256xi1>
    %14 = vector.broadcast %2 : i32 to vector<1x256xi32>
    %15 = arith.addi %4, %14 : vector<1x256xi32>
    %16 = arith.select %13, %15, %4 : vector<1x256xi1>, vector<1x256xi32>
    %c0_i32_3 = arith.constant 0 : i32
    %17 = vector.broadcast %c0_i32_3 : i32 to vector<1x256xi32>
    %18 = arith.cmpi sgt, %16, %17 : vector<1x256xi32>
    %19 = arith.extui %18 : vector<1x256xi1> to vector<1x256xi32>
    %20 = arith.sitofp %19 : vector<1x256xi32> to vector<1x256xf32>
    %c15_i32 = arith.constant 15 : i32
    %21 = vector.broadcast %c15_i32 : i32 to vector<1x256xi32>
    %22 = arith.cmpi slt, %16, %21 : vector<1x256xi32>
    %23 = arith.extui %22 : vector<1x256xi1> to vector<1x256xi32>
    %24 = arith.sitofp %23 : vector<1x256xi32> to vector<1x256xf32>
    %c0 = arith.constant 0 : index
    %c0_4 = arith.constant 0 : index
    %c0_5 = arith.constant 0 : index
    %25 = vector.load %arg1[%c0, %c0_4, %c0_5] : memref<1x4x256xf32, #tpu.memory_space<vmem>>, vector<1x4x256xf32>
    %26 = vector.shape_cast %25 : vector<1x4x256xf32> to vector<4x256xf32>
    %c0_6 = arith.constant 0 : index
    %c0_7 = arith.constant 0 : index
    %27 = vector.load %arg2[%c0_6, %c0_7] : memref<4x1xf32, #tpu.memory_space<vmem>>, vector<4x1xf32>
    %c0_8 = arith.constant 0 : index
    %c0_9 = arith.constant 0 : index
    %28 = vector.load %arg3[%c0_8, %c0_9] : memref<4x1xf32, #tpu.memory_space<vmem>>, vector<4x1xf32>
    %cst = arith.constant dense<0.000000e+00> : vector<4xf32>
    %29 = vector.multi_reduction <add>, %26, %cst [1] : vector<4x256xf32> to vector<4xf32>
    %30 = vector.shape_cast %29 : vector<4xf32> to vector<4x1xf32>
    %cst_10 = arith.constant 3.906250e-03 : f32
    %31 = vector.broadcast %cst_10 : f32 to vector<4x1xf32>
    %32 = arith.mulf %30, %31 : vector<4x1xf32>
    %33 = vector.broadcast %32 : vector<4x1xf32> to vector<4x256xf32>
    %34 = arith.subf %26, %33 : vector<4x256xf32>
    %35 = arith.mulf %34, %34 : vector<4x256xf32>
    %cst_11 = arith.constant dense<0.000000e+00> : vector<4xf32>
    %36 = vector.multi_reduction <add>, %35, %cst_11 [1] : vector<4x256xf32> to vector<4xf32>
    %37 = vector.shape_cast %36 : vector<4xf32> to vector<4x1xf32>
    %cst_12 = arith.constant 3.906250e-03 : f32
    %38 = vector.broadcast %cst_12 : f32 to vector<4x1xf32>
    %39 = arith.mulf %37, %38 : vector<4x1xf32>
    %cst_13 = arith.constant 9.99999974E-6 : f32
    %40 = vector.broadcast %cst_13 : f32 to vector<4x1xf32>
    %41 = arith.addf %39, %40 : vector<4x1xf32>
    %42 = math.rsqrt %41 : vector<4x1xf32>
    %43 = vector.broadcast %42 : vector<4x1xf32> to vector<4x256xf32>
    %44 = arith.mulf %34, %43 : vector<4x256xf32>
    %45 = vector.broadcast %27 : vector<4x1xf32> to vector<4x256xf32>
    %46 = arith.mulf %44, %45 : vector<4x256xf32>
    %47 = vector.broadcast %28 : vector<4x1xf32> to vector<4x256xf32>
    %48 = arith.addf %46, %47 : vector<4x256xf32>
    %cst_14 = arith.constant 0.000000e+00 : f32
    %49 = vector.broadcast %cst_14 : f32 to vector<4x256xf32>
    %50 = arith.maximumf %48, %49 : vector<4x256xf32>
    %cst_15 = arith.constant 0.000000e+00 : f32
    %51 = vector.broadcast %cst_15 : f32 to vector<4x17xf32>
    %52 = vector.extract_strided_slice %50 {offsets = [0, 0], sizes = [4, 239], strides = [1, 1]} : vector<4x256xf32> to vector<4x239xf32>
    %53 = tpu.concatenate %51, %52 in 1 : vector<4x17xf32>, vector<4x239xf32> -> vector<4x256xf32>
    %54 = vector.broadcast %20 : vector<1x256xf32> to vector<4x256xf32>
    %55 = arith.mulf %53, %54 : vector<4x256xf32>
    %cst_16 = arith.constant 0.000000e+00 : f32
    %56 = vector.broadcast %cst_16 : f32 to vector<4x16xf32>
    %57 = vector.extract_strided_slice %50 {offsets = [0, 0], sizes = [4, 240], strides = [1, 1]} : vector<4x256xf32> to vector<4x240xf32>
    %58 = tpu.concatenate %56, %57 in 1 : vector<4x16xf32>, vector<4x240xf32> -> vector<4x256xf32>
    %cst_17 = arith.constant 0.000000e+00 : f32
    %59 = vector.broadcast %cst_17 : f32 to vector<4x15xf32>
    %60 = vector.extract_strided_slice %50 {offsets = [0, 0], sizes = [4, 241], strides = [1, 1]} : vector<4x256xf32> to vector<4x241xf32>
    %61 = tpu.concatenate %59, %60 in 1 : vector<4x15xf32>, vector<4x241xf32> -> vector<4x256xf32>
    %62 = vector.broadcast %24 : vector<1x256xf32> to vector<4x256xf32>
    %63 = arith.mulf %61, %62 : vector<4x256xf32>
    %cst_18 = arith.constant 0.000000e+00 : f32
    %64 = vector.broadcast %cst_18 : f32 to vector<4x1xf32>
    %65 = vector.extract_strided_slice %50 {offsets = [0, 0], sizes = [4, 255], strides = [1, 1]} : vector<4x256xf32> to vector<4x255xf32>
    %66 = tpu.concatenate %64, %65 in 1 : vector<4x1xf32>, vector<4x255xf32> -> vector<4x256xf32>
    %67 = vector.broadcast %20 : vector<1x256xf32> to vector<4x256xf32>
    %68 = arith.mulf %66, %67 : vector<4x256xf32>
    %cst_19 = arith.constant 0.000000e+00 : f32
    %69 = vector.broadcast %cst_19 : f32 to vector<4x1xf32>
    %70 = vector.extract_strided_slice %50 {offsets = [0, 1], sizes = [4, 255], strides = [1, 1]} : vector<4x256xf32> to vector<4x255xf32>
    %71 = tpu.concatenate %70, %69 in 1 : vector<4x255xf32>, vector<4x1xf32> -> vector<4x256xf32>
    %72 = vector.broadcast %24 : vector<1x256xf32> to vector<4x256xf32>
    %73 = arith.mulf %71, %72 : vector<4x256xf32>
    %cst_20 = arith.constant 0.000000e+00 : f32
    %74 = vector.broadcast %cst_20 : f32 to vector<4x15xf32>
    %75 = vector.extract_strided_slice %50 {offsets = [0, 15], sizes = [4, 241], strides = [1, 1]} : vector<4x256xf32> to vector<4x241xf32>
    %76 = tpu.concatenate %75, %74 in 1 : vector<4x241xf32>, vector<4x15xf32> -> vector<4x256xf32>
    %77 = vector.broadcast %20 : vector<1x256xf32> to vector<4x256xf32>
    %78 = arith.mulf %76, %77 : vector<4x256xf32>
    %cst_21 = arith.constant 0.000000e+00 : f32
    %79 = vector.broadcast %cst_21 : f32 to vector<4x16xf32>
    %80 = vector.extract_strided_slice %50 {offsets = [0, 16], sizes = [4, 240], strides = [1, 1]} : vector<4x256xf32> to vector<4x240xf32>
    %81 = tpu.concatenate %80, %79 in 1 : vector<4x240xf32>, vector<4x16xf32> -> vector<4x256xf32>
    %cst_22 = arith.constant 0.000000e+00 : f32
    %82 = vector.broadcast %cst_22 : f32 to vector<4x17xf32>
    %83 = vector.extract_strided_slice %50 {offsets = [0, 17], sizes = [4, 239], strides = [1, 1]} : vector<4x256xf32> to vector<4x239xf32>
    %84 = tpu.concatenate %83, %82 in 1 : vector<4x239xf32>, vector<4x17xf32> -> vector<4x256xf32>
    %85 = vector.broadcast %24 : vector<1x256xf32> to vector<4x256xf32>
    %86 = arith.mulf %84, %85 : vector<4x256xf32>
    %87 = tpu.concatenate %55, %58, %63, %68, %50, %73, %78, %81, %86 in 0 : vector<4x256xf32>, vector<4x256xf32>, vector<4x256xf32>, vector<4x256xf32>, vector<4x256xf32>, vector<4x256xf32>, vector<4x256xf32>, vector<4x256xf32>, vector<4x256xf32> -> vector<36x256xf32>
    %c0_23 = arith.constant 0 : index
    %c0_24 = arith.constant 0 : index
    %88 = vector.load %arg4[%c0_23, %c0_24] : memref<4x36xf32, #tpu.memory_space<vmem>>, vector<4x36xf32>
    %cst_25 = arith.constant dense<0.000000e+00> : vector<4x256xf32>
    %89 = tpu.matmul %88, %87, %cst_25 {dimension_numbers = #tpu.dot_dimension_numbers<[1], [0], [0], [1], [0, 0, 1, 1], [], []>} : vector<4x36xf32>, vector<36x256xf32>, vector<4x256xf32> -> vector<4x256xf32>
    %c0_26 = arith.constant 0 : index
    %c0_27 = arith.constant 0 : index
    %90 = vector.load %arg5[%c0_26, %c0_27] : memref<4x1xf32, #tpu.memory_space<vmem>>, vector<4x1xf32>
    %c0_28 = arith.constant 0 : index
    %c0_29 = arith.constant 0 : index
    %91 = vector.load %arg6[%c0_28, %c0_29] : memref<4x1xf32, #tpu.memory_space<vmem>>, vector<4x1xf32>
    %cst_30 = arith.constant dense<0.000000e+00> : vector<4xf32>
    %92 = vector.multi_reduction <add>, %89, %cst_30 [1] : vector<4x256xf32> to vector<4xf32>
    %93 = vector.shape_cast %92 : vector<4xf32> to vector<4x1xf32>
    %cst_31 = arith.constant 3.906250e-03 : f32
    %94 = vector.broadcast %cst_31 : f32 to vector<4x1xf32>
    %95 = arith.mulf %93, %94 : vector<4x1xf32>
    %96 = vector.broadcast %95 : vector<4x1xf32> to vector<4x256xf32>
    %97 = arith.subf %89, %96 : vector<4x256xf32>
    %98 = arith.mulf %97, %97 : vector<4x256xf32>
    %cst_32 = arith.constant dense<0.000000e+00> : vector<4xf32>
    %99 = vector.multi_reduction <add>, %98, %cst_32 [1] : vector<4x256xf32> to vector<4xf32>
    %100 = vector.shape_cast %99 : vector<4xf32> to vector<4x1xf32>
    %cst_33 = arith.constant 3.906250e-03 : f32
    %101 = vector.broadcast %cst_33 : f32 to vector<4x1xf32>
    %102 = arith.mulf %100, %101 : vector<4x1xf32>
    %cst_34 = arith.constant 9.99999974E-6 : f32
    %103 = vector.broadcast %cst_34 : f32 to vector<4x1xf32>
    %104 = arith.addf %102, %103 : vector<4x1xf32>
    %105 = math.rsqrt %104 : vector<4x1xf32>
    %106 = vector.broadcast %105 : vector<4x1xf32> to vector<4x256xf32>
    %107 = arith.mulf %97, %106 : vector<4x256xf32>
    %108 = vector.broadcast %90 : vector<4x1xf32> to vector<4x256xf32>
    %109 = arith.mulf %107, %108 : vector<4x256xf32>
    %110 = vector.broadcast %91 : vector<4x1xf32> to vector<4x256xf32>
    %111 = arith.addf %109, %110 : vector<4x256xf32>
    %cst_35 = arith.constant 0.000000e+00 : f32
    %112 = vector.broadcast %cst_35 : f32 to vector<4x256xf32>
    %113 = arith.maximumf %111, %112 : vector<4x256xf32>
    %cst_36 = arith.constant 0.000000e+00 : f32
    %114 = vector.broadcast %cst_36 : f32 to vector<4x17xf32>
    %115 = vector.extract_strided_slice %113 {offsets = [0, 0], sizes = [4, 239], strides = [1, 1]} : vector<4x256xf32> to vector<4x239xf32>
    %116 = tpu.concatenate %114, %115 in 1 : vector<4x17xf32>, vector<4x239xf32> -> vector<4x256xf32>
    %117 = vector.broadcast %20 : vector<1x256xf32> to vector<4x256xf32>
    %118 = arith.mulf %116, %117 : vector<4x256xf32>
    %cst_37 = arith.constant 0.000000e+00 : f32
    %119 = vector.broadcast %cst_37 : f32 to vector<4x16xf32>
    %120 = vector.extract_strided_slice %113 {offsets = [0, 0], sizes = [4, 240], strides = [1, 1]} : vector<4x256xf32> to vector<4x240xf32>
    %121 = tpu.concatenate %119, %120 in 1 : vector<4x16xf32>, vector<4x240xf32> -> vector<4x256xf32>
    %cst_38 = arith.constant 0.000000e+00 : f32
    %122 = vector.broadcast %cst_38 : f32 to vector<4x15xf32>
    %123 = vector.extract_strided_slice %113 {offsets = [0, 0], sizes = [4, 241], strides = [1, 1]} : vector<4x256xf32> to vector<4x241xf32>
    %124 = tpu.concatenate %122, %123 in 1 : vector<4x15xf32>, vector<4x241xf32> -> vector<4x256xf32>
    %125 = vector.broadcast %24 : vector<1x256xf32> to vector<4x256xf32>
    %126 = arith.mulf %124, %125 : vector<4x256xf32>
    %cst_39 = arith.constant 0.000000e+00 : f32
    %127 = vector.broadcast %cst_39 : f32 to vector<4x1xf32>
    %128 = vector.extract_strided_slice %113 {offsets = [0, 0], sizes = [4, 255], strides = [1, 1]} : vector<4x256xf32> to vector<4x255xf32>
    %129 = tpu.concatenate %127, %128 in 1 : vector<4x1xf32>, vector<4x255xf32> -> vector<4x256xf32>
    %130 = vector.broadcast %20 : vector<1x256xf32> to vector<4x256xf32>
    %131 = arith.mulf %129, %130 : vector<4x256xf32>
    %cst_40 = arith.constant 0.000000e+00 : f32
    %132 = vector.broadcast %cst_40 : f32 to vector<4x1xf32>
    %133 = vector.extract_strided_slice %113 {offsets = [0, 1], sizes = [4, 255], strides = [1, 1]} : vector<4x256xf32> to vector<4x255xf32>
    %134 = tpu.concatenate %133, %132 in 1 : vector<4x255xf32>, vector<4x1xf32> -> vector<4x256xf32>
    %135 = vector.broadcast %24 : vector<1x256xf32> to vector<4x256xf32>
    %136 = arith.mulf %134, %135 : vector<4x256xf32>
    %cst_41 = arith.constant 0.000000e+00 : f32
    %137 = vector.broadcast %cst_41 : f32 to vector<4x15xf32>
    %138 = vector.extract_strided_slice %113 {offsets = [0, 15], sizes = [4, 241], strides = [1, 1]} : vector<4x256xf32> to vector<4x241xf32>
    %139 = tpu.concatenate %138, %137 in 1 : vector<4x241xf32>, vector<4x15xf32> -> vector<4x256xf32>
    %140 = vector.broadcast %20 : vector<1x256xf32> to vector<4x256xf32>
    %141 = arith.mulf %139, %140 : vector<4x256xf32>
    %cst_42 = arith.constant 0.000000e+00 : f32
    %142 = vector.broadcast %cst_42 : f32 to vector<4x16xf32>
    %143 = vector.extract_strided_slice %113 {offsets = [0, 16], sizes = [4, 240], strides = [1, 1]} : vector<4x256xf32> to vector<4x240xf32>
    %144 = tpu.concatenate %143, %142 in 1 : vector<4x240xf32>, vector<4x16xf32> -> vector<4x256xf32>
    %cst_43 = arith.constant 0.000000e+00 : f32
    %145 = vector.broadcast %cst_43 : f32 to vector<4x17xf32>
    %146 = vector.extract_strided_slice %113 {offsets = [0, 17], sizes = [4, 239], strides = [1, 1]} : vector<4x256xf32> to vector<4x239xf32>
    %147 = tpu.concatenate %146, %145 in 1 : vector<4x239xf32>, vector<4x17xf32> -> vector<4x256xf32>
    %148 = vector.broadcast %24 : vector<1x256xf32> to vector<4x256xf32>
    %149 = arith.mulf %147, %148 : vector<4x256xf32>
    %150 = tpu.concatenate %118, %121, %126, %131, %113, %136, %141, %144, %149 in 0 : vector<4x256xf32>, vector<4x256xf32>, vector<4x256xf32>, vector<4x256xf32>, vector<4x256xf32>, vector<4x256xf32>, vector<4x256xf32>, vector<4x256xf32>, vector<4x256xf32> -> vector<36x256xf32>
    %c0_44 = arith.constant 0 : index
    %c0_45 = arith.constant 0 : index
    %151 = vector.load %arg7[%c0_44, %c0_45] : memref<4x36xf32, #tpu.memory_space<vmem>>, vector<4x36xf32>
    %cst_46 = arith.constant dense<0.000000e+00> : vector<4x256xf32>
    %152 = tpu.matmul %151, %150, %cst_46 {dimension_numbers = #tpu.dot_dimension_numbers<[1], [0], [0], [1], [0, 0, 1, 1], [], []>} : vector<4x36xf32>, vector<36x256xf32>, vector<4x256xf32> -> vector<4x256xf32>
    %c0_47 = arith.constant 0 : index
    %c0_48 = arith.constant 0 : index
    %c0_49 = arith.constant 0 : index
    %153 = vector.load %arg1[%c0_47, %c0_48, %c0_49] : memref<1x4x256xf32, #tpu.memory_space<vmem>>, vector<1x4x256xf32>
    %154 = vector.shape_cast %153 : vector<1x4x256xf32> to vector<4x256xf32>
    %155 = arith.addf %152, %154 : vector<4x256xf32>
    %c0_50 = arith.constant 0 : index
    %c0_51 = arith.constant 0 : index
    %c0_52 = arith.constant 0 : index
    %156 = vector.load %arg8[%c0_50, %c0_51, %c0_52] : memref<1x4x256xf32, #tpu.memory_space<vmem>>, vector<1x4x256xf32>
    %157 = vector.shape_cast %156 : vector<1x4x256xf32> to vector<4x256xf32>
    %158 = vector.shape_cast %155 : vector<4x256xf32> to vector<1x4x256xf32>
    tpu.vector_store %arg8[%c0_50, %c0_51, %c0_52], %158 {strides = array<i32>} : memref<1x4x256xf32, #tpu.memory_space<vmem>>, vector<1x4x256xf32>,
    return
  }
  func.func @transform_0(%arg0: i32) -> (i32, i32, i32) {
    %c0_i32 = arith.constant 0 : i32
    %c0_i32_0 = arith.constant 0 : i32
    %c0_i32_1 = arith.constant 0 : i32
    return %arg0, %c0_i32, %c0_i32_0 : i32, i32, i32
  }
  func.func @transform_1(%arg0: i32) -> (i32, i32) {
    %c0_i32 = arith.constant 0 : i32
    %c0_i32_0 = arith.constant 0 : i32
    %c0_i32_1 = arith.constant 0 : i32
    return %c0_i32, %c0_i32_0 : i32, i32
  }
  func.func @transform_2(%arg0: i32) -> (i32, i32) {
    %c0_i32 = arith.constant 0 : i32
    %c0_i32_0 = arith.constant 0 : i32
    %c0_i32_1 = arith.constant 0 : i32
    return %c0_i32, %c0_i32_0 : i32, i32
  }
  func.func @transform_3(%arg0: i32) -> (i32, i32) {
    %c0_i32 = arith.constant 0 : i32
    %c0_i32_0 = arith.constant 0 : i32
    %c0_i32_1 = arith.constant 0 : i32
    return %c0_i32, %c0_i32_0 : i32, i32
  }
  func.func @transform_4(%arg0: i32) -> (i32, i32) {
    %c0_i32 = arith.constant 0 : i32
    %c0_i32_0 = arith.constant 0 : i32
    %c0_i32_1 = arith.constant 0 : i32
    return %c0_i32, %c0_i32_0 : i32, i32
  }
  func.func @transform_5(%arg0: i32) -> (i32, i32) {
    %c0_i32 = arith.constant 0 : i32
    %c0_i32_0 = arith.constant 0 : i32
    %c0_i32_1 = arith.constant 0 : i32
    return %c0_i32, %c0_i32_0 : i32, i32
  }
  func.func @transform_6(%arg0: i32) -> (i32, i32) {
    %c0_i32 = arith.constant 0 : i32
    %c0_i32_0 = arith.constant 0 : i32
    %c0_i32_1 = arith.constant 0 : i32
    return %c0_i32, %c0_i32_0 : i32, i32
  }
  func.func @transform_7(%arg0: i32) -> (i32, i32, i32) {
    %c0_i32 = arith.constant 0 : i32
    %c0_i32_0 = arith.constant 0 : i32
    %c0_i32_1 = arith.constant 0 : i32
    return %arg0, %c0_i32, %c0_i32_0 : i32, i32, i32
  }
}

</mosaic_0001>

<llo_original>
// kernel: tpu_custom_call.1
$region0: #{tpu_custom_call.1}
  #allocation0 [shape = 'u32[]', space=smem, size = 0x4, offset = 0x4, fixed_abs, tag = 'smem constant byte address 0x4 - core index']
  #allocation1 [shape = 'u32[144,128]{1,0:T(1,128)}', space=vmem, size = 0x12000, scoped, tag = 'internal scratch']
  %s0 = inlined_call_operand.vmem [shape: f32[2,4,256], index: 0, kind: input, shape index: {}]
  %s1 = inlined_call_operand.vmem [shape: f32[4,1], index: 1, kind: input, shape index: {}]
  %s2 = inlined_call_operand.vmem [shape: f32[4,1], index: 2, kind: input, shape index: {}]
  %s3 = inlined_call_operand.vmem [shape: f32[4,36], index: 3, kind: input, shape index: {}]
  %s4 = inlined_call_operand.vmem [shape: f32[4,1], index: 4, kind: input, shape index: {}]
  %s5 = inlined_call_operand.vmem [shape: f32[4,1], index: 5, kind: input, shape index: {}]
  %s6 = inlined_call_operand.vmem [shape: f32[4,36], index: 6, kind: input, shape index: {}]
  %s7 = inlined_call_operand.hbm [shape: f32[2,4,256], index: 7, kind: output, shape index: {}]
  %s8 = sld [smem:[#allocation0]]
  $region61: #{tpu_custom_call.1} parent=0
    _
  %s10 = ssub.s32 1, %s8
  %s11 = scalar_select 0, %s10, %s8
  $region1: #{tpu_custom_call.1} parent=0
    #allocation2 [shape = 'u8[8192]{0}', space=vmem, size = 0x2000, scoped, tag = 'output window, operand 0']
    #allocation3 [shape = 's32[2]{0}', space=sflag, size = 0x8, scoped, tag = 'scoped memory for tpu_custom_call.1']
    %12 = vsyncpa [#allocation3], 0
    %s13 = scalar_lea.sflag [#allocation3], 1
    %14 = vsyncpa %s13, 0
    loop: start=0, step=1, limit=4
    $region2: #{tpu_custom_call.1} parent=1 // loop_pre_header
      _
    $region3: #{tpu_custom_call.1} parent=1 // loop_header
      %s16 = sphi 0, %s20
      %p17 = scmp.ge.s32.totalorder %s16, 4
      %s26 = sphi 0, %s28
      %s29 = sphi 0, %s26
      %s30 = sphi 0, %s29
      %s46 = sphi 0, %s30
      %s50 = sphi 0, %s50
      %s52 = sphi 0, %s50
      %s53 = sphi 0, %s52
      %s67 = sphi 0, %s53
      %s71 = sphi 0, %s71
      %s73 = sphi 0, %s71
      %s74 = sphi 0, %s73
      %s88 = sphi 0, %s74
      %s92 = sphi 0, %s92
      %s94 = sphi 0, %s92
      %s95 = sphi 0, %s94
      %s109 = sphi 0, %s95
      %s113 = sphi 0, %s113
      %s115 = sphi 0, %s113
      %s116 = sphi 0, %s115
      %s130 = sphi 0, %s116
      %s134 = sphi 0, %s134
      %s136 = sphi 0, %s134
      %s137 = sphi 0, %s136
      %s151 = sphi 0, %s137
      %s155 = sphi 0, %s155
      %s157 = sphi 0, %s155
      %s158 = sphi 0, %s157
      %s172 = sphi 0, %s158
      %s178 = sphi 0, %s180
      %s181 = sphi 0, %s178
      %s182 = sphi 0, %s181
      %s198 = sphi 0, %s182
    $region4: #{tpu_custom_call.1} parent=1 // loop_header_branch
      %19 = sbr.rel (%p17) target = $region8
    $region5: #{tpu_custom_call.1} parent=1 // loop_body
      %s21 = ssub.s32 %s16, 1
      %s22 = ssub.s32 %s16, 2
      %s23 = sadd.s32 %s16, 1
      %s24 = ssub.s32 %s16, %s23
      %p25 = scmp.eq.s32.totalorder %s24, 0
      %s27 = sadd.s32 %s26, 1
      %s28 = scalar_select %p25, %s26, %s27
      %p31 = pneg %p25
      %p32 = scmp.eq.s32.totalorder %s16, 1
      %p33 = por %p31, %p32
      %p34 = scmp.ne.s32.totalorder %s26, %s29
      %p35 = scmp.eq.s32.totalorder %s16, 0
      %p36 = por %p34, %p35
      %p37 = scmp.ne.s32.totalorder %s26, %s29
      %p38 = scmp.eq.s32.totalorder %s21, 1
      %p39 = por %p37, %p38
      %p40 = scmp.ne.s32.totalorder %s29, %s30
      %p41 = scmp.eq.s32.totalorder %s21, 0
      %p42 = por %p40, %p41
      %p43 = scmp.ne.s32.totalorder %s29, %s30
      %p44 = scmp.eq.s32.totalorder %s22, 1
      %p45 = por %p43, %p44
      %p47 = scmp.ne.s32.totalorder %s30, %s46
      %p48 = scmp.eq.s32.totalorder %s22, 0
      %p49 = por %p47, %p48
      %s51 = sadd.s32 %s50, 1
      %p54 = scmp.eq.s32.totalorder %s16, 1
      %p55 = scmp.ne.s32.totalorder %s50, %s52
      %p56 = scmp.eq.s32.totalorder %s16, 0
      %p57 = por %p55, %p56
      %p58 = scmp.ne.s32.totalorder %s50, %s52
      %p59 = scmp.eq.s32.totalorder %s21, 1
      %p60 = por %p58, %p59
      %p61 = scmp.ne.s32.totalorder %s52, %s53
      %p62 = scmp.eq.s32.totalorder %s21, 0
      %p63 = por %p61, %p62
      %p64 = scmp.ne.s32.totalorder %s52, %s53
      %p65 = scmp.eq.s32.totalorder %s22, 1
      %p66 = por %p64, %p65
      %p68 = scmp.ne.s32.totalorder %s53, %s67
      %p69 = scmp.eq.s32.totalorder %s22, 0
      %p70 = por %p68, %p69
      %s72 = sadd.s32 %s71, 1
      %p75 = scmp.eq.s32.totalorder %s16, 1
      %p76 = scmp.ne.s32.totalorder %s71, %s73
      %p77 = scmp.eq.s32.totalorder %s16, 0
      %p78 = por %p76, %p77
      %p79 = scmp.ne.s32.totalorder %s71, %s73
      %p80 = scmp.eq.s32.totalorder %s21, 1
      %p81 = por %p79, %p80
      %p82 = scmp.ne.s32.totalorder %s73, %s74
      %p83 = scmp.eq.s32.totalorder %s21, 0
      %p84 = por %p82, %p83
      %p85 = scmp.ne.s32.totalorder %s73, %s74
      %p86 = scmp.eq.s32.totalorder %s22, 1
      %p87 = por %p85, %p86
      %p89 = scmp.ne.s32.totalorder %s74, %s88
      %p90 = scmp.eq.s32.totalorder %s22, 0
      %p91 = por %p89, %p90
      %s93 = sadd.s32 %s92, 1
      %p96 = scmp.eq.s32.totalorder %s16, 1
      %p97 = scmp.ne.s32.totalorder %s92, %s94
      %p98 = scmp.eq.s32.totalorder %s16, 0
      %p99 = por %p97, %p98
      %p100 = scmp.ne.s32.totalorder %s92, %s94
      %p101 = scmp.eq.s32.totalorder %s21, 1
      %p102 = por %p100, %p101
      %p103 = scmp.ne.s32.totalorder %s94, %s95
      %p104 = scmp.eq.s32.totalorder %s21, 0
      %p105 = por %p103, %p104
      %p106 = scmp.ne.s32.totalorder %s94, %s95
      %p107 = scmp.eq.s32.totalorder %s22, 1
      %p108 = por %p106, %p107
      %p110 = scmp.ne.s32.totalorder %s95, %s109
      %p111 = scmp.eq.s32.totalorder %s22, 0
      %p112 = por %p110, %p111
      %s114 = sadd.s32 %s113, 1
      %p117 = scmp.eq.s32.totalorder %s16, 1
      %p118 = scmp.ne.s32.totalorder %s113, %s115
      %p119 = scmp.eq.s32.totalorder %s16, 0
      %p120 = por %p118, %p119
      %p121 = scmp.ne.s32.totalorder %s113, %s115
      %p122 = scmp.eq.s32.totalorder %s21, 1
      %p123 = por %p121, %p122
      %p124 = scmp.ne.s32.totalorder %s115, %s116
      %p125 = scmp.eq.s32.totalorder %s21, 0
      %p126 = por %p124, %p125
      %p127 = scmp.ne.s32.totalorder %s115, %s116
      %p128 = scmp.eq.s32.totalorder %s22, 1
      %p129 = por %p127, %p128
      %p131 = scmp.ne.s32.totalorder %s116, %s130
      %p132 = scmp.eq.s32.totalorder %s22, 0
      %p133 = por %p131, %p132
      %s135 = sadd.s32 %s134, 1
      %p138 = scmp.eq.s32.totalorder %s16, 1
      %p139 = scmp.ne.s32.totalorder %s134, %s136
      %p140 = scmp.eq.s32.totalorder %s16, 0
      %p141 = por %p139, %p140
      %p142 = scmp.ne.s32.totalorder %s134, %s136
      %p143 = scmp.eq.s32.totalorder %s21, 1
      %p144 = por %p142, %p143
      %p145 = scmp.ne.s32.totalorder %s136, %s137
      %p146 = scmp.eq.s32.totalorder %s21, 0
      %p147 = por %p145, %p146
      %p148 = scmp.ne.s32.totalorder %s136, %s137
      %p149 = scmp.eq.s32.totalorder %s22, 1
      %p150 = por %p148, %p149
      %p152 = scmp.ne.s32.totalorder %s137, %s151
      %p153 = scmp.eq.s32.totalorder %s22, 0
      %p154 = por %p152, %p153
      %s156 = sadd.s32 %s155, 1
      %p159 = scmp.eq.s32.totalorder %s16, 1
      %p160 = scmp.ne.s32.totalorder %s155, %s157
      %p161 = scmp.eq.s32.totalorder %s16, 0
      %p162 = por %p160, %p161
      %p163 = scmp.ne.s32.totalorder %s155, %s157
      %p164 = scmp.eq.s32.totalorder %s21, 1
      %p165 = por %p163, %p164
      %p166 = scmp.ne.s32.totalorder %s157, %s158
      %p167 = scmp.eq.s32.totalorder %s21, 0
      %p168 = por %p166, %p167
      %p169 = scmp.ne.s32.totalorder %s157, %s158
      %p170 = scmp.eq.s32.totalorder %s22, 1
      %p171 = por %p169, %p170
      %p173 = scmp.ne.s32.totalorder %s158, %s172
      %p174 = scmp.eq.s32.totalorder %s22, 0
      %p175 = por %p173, %p174
      %s176 = ssub.s32 %s16, %s23
      %p177 = scmp.eq.s32.totalorder %s176, 0
      %s179 = sadd.s32 %s178, 1
      %s180 = scalar_select %p177, %s178, %s179
      %p183 = pneg %p177
      %p184 = scmp.eq.s32.totalorder %s16, 1
      %p185 = por %p183, %p184
      %p186 = scmp.ne.s32.totalorder %s178, %s181
      %p187 = scmp.eq.s32.totalorder %s16, 0
      %p188 = por %p186, %p187
      %p189 = scmp.ne.s32.totalorder %s178, %s181
      %p190 = scmp.eq.s32.totalorder %s21, 1
      %p191 = por %p189, %p190
      %p192 = scmp.ne.s32.totalorder %s181, %s182
      %p193 = scmp.eq.s32.totalorder %s21, 0
      %p194 = por %p192, %p193
      %p195 = scmp.ne.s32.totalorder %s181, %s182
      %p196 = scmp.eq.s32.totalorder %s22, 1
      %p197 = por %p195, %p196
      %p199 = scmp.ne.s32.totalorder %s182, %s198
      %p200 = scmp.eq.s32.totalorder %s22, 0
      %p201 = por %p199, %p200
      %p202 = scmp.le.s32.totalorder 1, %s16
      %p203 = scmp.lt.s32.totalorder %s16, 3
      %p204 = pnand %p202, %p203
      %p205 = pneg %p204
      // Predicated region
      $region9: #{tpu_custom_call.1} parent=5 // pred_check
        _
      $region10: #{tpu_custom_call.1} parent=5 // pred_check_branch
        %207 = sbr.rel (%p204) target = $region12
      $region11: #{tpu_custom_call.1} parent=5 // pred_region
        %s208 = ssub.s32 %s16, 1
        // Predicated region
        $region13: #{tpu_custom_call.1} parent=11 // pred_check
          %p209 = pneg %p63
        $region14: #{tpu_custom_call.1} parent=11 // pred_check_branch
          %211 = sbr.rel (%p209) target = $region16
        $region15: #{tpu_custom_call.1} parent=11 // pred_region
          _
        $region16: #{tpu_custom_call.1} parent=11 // pred_fallthru
          _
        // Predicated region
        $region17: #{tpu_custom_call.1} parent=11 // pred_check
          %p212 = pneg %p84
        $region18: #{tpu_custom_call.1} parent=11 // pred_check_branch
          %214 = sbr.rel (%p212) target = $region20
        $region19: #{tpu_custom_call.1} parent=11 // pred_region
          _
        $region20: #{tpu_custom_call.1} parent=11 // pred_fallthru
          _
        // Predicated region
        $region21: #{tpu_custom_call.1} parent=11 // pred_check
          %p215 = pneg %p105
        $region22: #{tpu_custom_call.1} parent=11 // pred_check_branch
          %217 = sbr.rel (%p215) target = $region24
        $region23: #{tpu_custom_call.1} parent=11 // pred_region
          _
        $region24: #{tpu_custom_call.1} parent=11 // pred_fallthru
          _
        // Predicated region
        $region25: #{tpu_custom_call.1} parent=11 // pred_check
          %p218 = pneg %p126
        $region26: #{tpu_custom_call.1} parent=11 // pred_check_branch
          %220 = sbr.rel (%p218) target = $region28
        $region27: #{tpu_custom_call.1} parent=11 // pred_region
          _
        $region28: #{tpu_custom_call.1} parent=11 // pred_fallthru
          _
        // Predicated region
        $region29: #{tpu_custom_call.1} parent=11 // pred_check
          %p221 = pneg %p147
        $region30: #{tpu_custom_call.1} parent=11 // pred_check_branch
          %223 = sbr.rel (%p221) target = $region32
        $region31: #{tpu_custom_call.1} parent=11 // pred_region
          _
        $region32: #{tpu_custom_call.1} parent=11 // pred_fallthru
          _
        // Predicated region
        $region33: #{tpu_custom_call.1} parent=11 // pred_check
          %p224 = pneg %p168
        $region34: #{tpu_custom_call.1} parent=11 // pred_check_branch
          %226 = sbr.rel (%p224) target = $region36
        $region35: #{tpu_custom_call.1} parent=11 // pred_region
          _
        $region36: #{tpu_custom_call.1} parent=11 // pred_fallthru
          _
      $region12: #{tpu_custom_call.1} parent=5 // pred_fallthru
        _
      %p227 = scmp.lt.s32.totalorder %s16, 2
      // Predicated region
      $region37: #{tpu_custom_call.1} parent=5 // pred_check
        %p228 = pneg %p227
      $region38: #{tpu_custom_call.1} parent=5 // pred_check_branch
        %230 = sbr.rel (%p228) target = $region40
      $region39: #{tpu_custom_call.1} parent=5 // pred_region
        // Predicated region
        $region41: #{tpu_custom_call.1} parent=39 // pred_check
          %p231 = pneg %p36
        $region42: #{tpu_custom_call.1} parent=39 // pred_check_branch
          %233 = sbr.rel (%p231) target = $region44
        $region43: #{tpu_custom_call.1} parent=39 // pred_region
          %p234 = scmp.lt.s32.totalorder %s16, 1
          %s235 = scalar_select %p234, %s16, 1
          %s236 = smul.addr %s235, 2
          %s237 = smul.addr %s236, 4
          %s238 = scalar_lea.vmem %s0, %s237
        $region44: #{tpu_custom_call.1} parent=39 // pred_fallthru
          _
      $region40: #{tpu_custom_call.1} parent=5 // pred_fallthru
        _
      %p239 = scmp.le.s32.totalorder 1, %s16
      %p240 = scmp.lt.s32.totalorder %s16, 3
      %p241 = pnand %p239, %p240
      %p242 = pneg %p241
      // Predicated region
      $region45: #{tpu_custom_call.1} parent=5 // pred_check
        _
      $region46: #{tpu_custom_call.1} parent=5 // pred_check_branch
        %244 = sbr.rel (%p241) target = $region48
      $region47: #{tpu_custom_call.1} parent=5 // pred_region
        %s245 = ssub.s32 %s16, 1
        %p246 = scmp.lt.s32.totalorder %s21, 1
        %s247 = scalar_select %p246, %s21, 1
        %s248 = smul.addr %s247, 2
        %s249 = smul.addr %s248, 4
        %s250 = scalar_lea.vmem %s0, %s249
        %p251 = pneg %p42
        %p252 = pneg %p39
        %p253 = pneg %p63
        %p254 = pneg %p60
        %p255 = pneg %p84
        %p256 = pneg %p81
        %p257 = pneg %p105
        %p258 = pneg %p102
        %p259 = pneg %p126
        %p260 = pneg %p123
        %p261 = pneg %p147
        %p262 = pneg %p144
        %p263 = pneg %p168
        %p264 = pneg %p165
        %p265 = pneg %p194
        %p266 = pneg %p191
        %s267 = sand.u32 %s181, 1
        %s268 = scalar_lea.sflag [#allocation3], %s267
        %s269 = sand.u32 %s181, 1
        %s270 = smul.addr %s269, 8
        %s271 = scalar_lea.vmem [#allocation2], %s270
        %p272 = scmp.lt.s32.totalorder %s21, 1
        %s273 = scalar_select %p272, %s21, 1
        %s274 = smul.addr %s273, 2
        %s275 = smul.addr %s274, 4
        %s276 = scalar_lea.vmem %s0, %s275
        %v277 = vlaneseq
        %v278 = vand.u32 %v277, 127
        %v279 = vadd.s32 %v278, 128
        %vm280 = vcmp.lt.s32.totalorder %v278, 0
        %v281 = vsub.s32 0, %v278
        %v282 = vsel %vm280, %v281, %v278
        %v283 = vshrl.u32 %v282, 4
        %v284 = vand.u32 %v282, 15
        %v285 = vsub.s32 0, %v284
        %v286 = vsel %vm280, %v285, %v284
        %vm287 = vcmp.lt.s32.totalorder %v279, 0
        %v288 = vsub.s32 0, %v279
        %v289 = vsel %vm287, %v288, %v279
        %v290 = vshrl.u32 %v289, 4
        %v291 = vand.u32 %v289, 15
        %v292 = vsub.s32 0, %v291
        %v293 = vsel %vm287, %v292, %v291
        %vm294 = vcmp.ne.s32.totalorder %v286, 0
        %vm295 = vcmp.ne.s32.totalorder %v293, 0
        %vm296 = vcmp.lt.s32.totalorder %v286, 0
        %vm297 = vcmp.lt.s32.totalorder %v293, 0
        %vm298 = vmand %vm296, %vm294
        %vm299 = vmand %vm297, %vm295
        %v300 = vadd.s32 %v286, 16
        %v301 = vadd.s32 %v293, 16
        %v302 = vsel %vm298, %v300, %v286
        %v303 = vsel %vm299, %v301, %v293
        %vm304 = vcmp.gt.s32.totalorder %v302, 0
        %vm305 = vcmp.gt.s32.totalorder %v303, 0
        %v306 = vsel %vm304, 1, 0
        %v307 = vsel %vm305, 1, 0
        %v308 = vcvt.s32.f32 %v306
        %v309 = vcvt.s32.f32 %v307
        %vm310 = vcmp.lt.s32.totalorder %v302, 15
        %vm311 = vcmp.lt.s32.totalorder %v303, 15
        %v312 = vsel %vm310, 1, 0
        %v313 = vsel %vm311, 1, 0
        %v314 = vcvt.s32.f32 %v312
        %v315 = vcvt.s32.f32 %v313
        %v316 = vld [vmem:[%s276] sm:$0xff]
        %v317 = vld [vmem:[%s1] sm:$0xf]
        %v318 = vld [vmem:[%s2] sm:$0xf]
        %v320 = vcombine.high %v316, %v316
        %vm322 = vcmask 1043456
        %v323 = vsel %vm322, %v316, 0.0
        %v324 = vsel %vm322, %v320, 0.0
        %v325 = vadd.f32 %v323, %v324
        %326 = vadd.xlane.f32.xlu0 %v325
        %v327 = vpop.xlane.xlu0 %326
        %v328 = vmul.f32 %v327, 0.00390625
        %v331 = vunpack.c.l.s4 839922192
        %v332 = vunpack.c.0.s8 %v331
        %v333 = vlaneseq
        %v334 = vshrl.u32 %v333, 7
        %v335 = vsub.s32 %v332, %v334
        %v336 = vrot.slane %v328, %v335
        %v338 = vsub.f32 %v316, %v336
        %v339 = vmul.f32 %v338, %v338
        %v341 = vcombine.high %v339, %v339
        %v343 = vsel %vm322, %v339, 0.0
        %v344 = vsel %vm322, %v341, 0.0
        %v345 = vadd.f32 %v343, %v344
        %346 = vadd.xlane.f32.xlu0 %v345
        %v347 = vpop.xlane.xlu0 %346
        %v348 = vmul.f32 %v347, 0.00390625
        %v349 = vadd.f32 %v348, 1e-05
        %v350 = vrsqrt.pop %v349
        %v353 = vunpack.c.l.s4 839922192
        %v354 = vunpack.c.0.s8 %v353
        %v355 = vlaneseq
        %v356 = vshrl.u32 %v355, 7
        %v357 = vsub.s32 %v354, %v356
        %v358 = vrot.slane %v350, %v357
        %v360 = vmul.f32 %v338, %v358
        %362 = vset.pattern.permute.xlu0 0
        %363 = vperm.xlu0 %362, %v317
        %v364 = vpop.permute.xlu0 %363
        %v366 = vunpack.c.l.s4 839922192
        %v367 = vunpack.c.0.s8 %v366
        %v368 = vlaneseq
        %v369 = vshrl.u32 %v368, 7
        %v370 = vsub.s32 %v367, %v369
        %v371 = vrot.slane %v364, %v370
        %v373 = vmul.f32 %v360, %v371
        %375 = vset.pattern.permute.xlu0 0
        %376 = vperm.xlu0 %375, %v318
        %v377 = vpop.permute.xlu0 %376
        %v379 = vunpack.c.l.s4 839922192
        %v380 = vunpack.c.0.s8 %v379
        %v381 = vlaneseq
        %v382 = vshrl.u32 %v381, 7
        %v383 = vsub.s32 %v380, %v382
        %v384 = vrot.slane %v377, %v383
        %v386 = vadd.f32 %v373, %v384
        %v387 = vmax.f32 %v386, 0.0
        %v389 = vcombine.high %v387, %v387
        %390 = vrot.lane.b32.xlu0 %v387, 17
        %v391 = vpop.permute.xlu0 %390
        %392 = vrot.lane.b32.xlu0 %v389, 17
        %v393 = vpop.permute.xlu0 %392
        %vm394 = vcmask 138240
        %v395 = vsel %vm394, %v391, %v393
        %v398 = vsel %vm394, 0.0, %v391
        %v399 = vmul.f32 %v398, %v308
        %v400 = vmul.f32 %v395, %v309
        %401 = vrot.lane.b32.xlu0 %v387, 16
        %v402 = vpop.permute.xlu0 %401
        %403 = vrot.lane.b32.xlu0 %v389, 16
        %v404 = vpop.permute.xlu0 %403
        %vm405 = vcmask 130048
        %v406 = vsel %vm405, %v402, %v404
        %v408 = vsel %vm405, 0.0, %v402
        %409 = vrot.lane.b32.xlu0 %v387, 15
        %v410 = vpop.permute.xlu0 %409
        %411 = vrot.lane.b32.xlu0 %v389, 15
        %v412 = vpop.permute.xlu0 %411
        %vm413 = vcmask 121856
        %v414 = vsel %vm413, %v410, %v412
        %v417 = vsel %vm413, 0.0, %v410
        %v418 = vmul.f32 %v417, %v314
        %v419 = vmul.f32 %v414, %v315
        %420 = vrot.lane.b32.xlu0 %v387, 1
        %v421 = vpop.permute.xlu0 %420
        %422 = vrot.lane.b32.xlu0 %v389, 1
        %v423 = vpop.permute.xlu0 %422
        %vm424 = vcmask 7168
        %v425 = vsel %vm424, %v421, %v423
        %v428 = vsel %vm424, 0.0, %v421
        %v429 = vmul.f32 %v428, %v308
        %v430 = vmul.f32 %v425, %v309
        %431 = vrot.lane.b32.xlu0 %v387, 127
        %v432 = vpop.permute.xlu0 %431
        %433 = vrot.lane.b32.xlu0 %v389, 127
        %v434 = vpop.permute.xlu0 %433
        %vm435 = vcmask 1039360
        %v436 = vsel %vm435, %v432, %v434
        %v439 = vsel %vm435, %v434, 0.0
        %v440 = vmul.f32 %v436, %v314
        %v441 = vmul.f32 %v439, %v315
        %442 = vrot.lane.b32.xlu0 %v387, 113
        %v443 = vpop.permute.xlu0 %442
        %444 = vrot.lane.b32.xlu0 %v389, 113
        %v445 = vpop.permute.xlu0 %444
        %vm446 = vcmask 924672
        %v447 = vsel %vm446, %v443, %v445
        %v450 = vsel %vm446, %v445, 0.0
        %v451 = vmul.f32 %v447, %v308
        %v452 = vmul.f32 %v450, %v309
        %453 = vrot.lane.b32.xlu0 %v387, 112
        %v454 = vpop.permute.xlu0 %453
        %455 = vrot.lane.b32.xlu0 %v389, 112
        %v456 = vpop.permute.xlu0 %455
        %vm457 = vcmask 916480
        %v458 = vsel %vm457, %v454, %v456
        %v460 = vsel %vm457, %v456, 0.0
        %461 = vrot.lane.b32.xlu0 %v387, 111
        %v462 = vpop.permute.xlu0 %461
        %463 = vrot.lane.b32.xlu0 %v389, 111
        %v464 = vpop.permute.xlu0 %463
        %vm465 = vcmask 908288
        %v466 = vsel %vm465, %v462, %v464
        %v469 = vsel %vm465, %v464, 0.0
        %v470 = vmul.f32 %v466, %v314
        %v471 = vmul.f32 %v469, %v315
        %v473 = vrot.slane %v408, 4
        %v474 = vrot.slane %v406, 4
        %v479 = vrot.slane %v429, 4
        %v480 = vrot.slane %v430, 4
        %v486 = vrot.slane %v440, 4
        %v487 = vrot.slane %v441, 4
        %v491 = vrot.slane %v458, 4
        %v492 = vrot.slane %v460, 4
        %v495 = vsel %vm322, %v399, %v473
        %v496 = vsel %vm322, %v400, %v474
        %v497 = vsel %vm322, %v418, %v479
        %v498 = vsel %vm322, %v419, %v480
        %v499 = vsel %vm322, %v387, %v486
        %v500 = vsel %vm322, %v389, %v487
        %v501 = vsel %vm322, %v451, %v491
        %v502 = vsel %vm322, %v452, %v492
        %v503 = vld [vmem:[%s3] sm:$0xf]
        %vm504 = vcmask 293888
        %v506 = vsel %vm504, %v503, 0
        %v509 = vsel %vm322, %v470, 0
        %v512 = vsel %vm322, %v471, 0
        %514 = vmatprep.subr.mxu0 %v496
        %515 = vmatpush1.msra.mxu0 %v495
        %516 = vmatprep.subr.mxu0 %v498
        %517 = vmatpush1.msra.mxu0 %v497
        %518 = vmatprep.subr.mxu0 %v500
        %519 = vmatpush1.msra.mxu0 %v499
        %520 = vmatprep.subr.mxu0 %v502
        %521 = vmatpush1.msra.mxu0 %v501
        %522 = vmatprep.subr.mxu0 %v512
        %523 = vmatpush1.msra.mxu0 %v509
        %524 = vmatprep.subr.mxu0 0.0
        %525 = vmatpush1.msra.mxu0 0.0
        %526 = vmatprep.subr.mxu0 0.0
        %527 = vmatpush1.msra.mxu0 0.0
        %528 = vmatprep.subr.mxu0 0.0
        %529 = vmatpush1.msra.mxu0 0.0
        %530 = vmatprep.subr.mxu0 0.0
        %531 = vmatpush1.msra.mxu0 0.0
        %532 = vmatprep.subr.mxu0 0.0
        %533 = vmatpush1.msra.mxu0 0.0
        %534 = vmatprep.subr.mxu0 0.0
        %535 = vmatpush1.msra.mxu0 0.0
        %536 = vmatprep.subr.mxu0 0.0
        %537 = vmatpush1.msra.mxu0 0.0
        %538 = vmatprep.subr.mxu0 0.0
        %539 = vmatpush1.msra.mxu0 0.0
        %540 = vmatprep.subr.mxu0 0.0
        %541 = vmatpush1.msra.mxu0 0.0
        %542 = vmatprep.subr.mxu0 0.0
        %543 = vmatpush1.msra.mxu0 0.0
        %544 = vmatprep.subr.mxu0 0.0
        %545 = vmatpush1.msra.mxu0 0.0
        %546 = vmatprep.subr.mxu0 0.0
        %547 = vmatpush1.msra.mxu0 0.0
        %548 = vmatprep.subr.mxu0 0.0
        %549 = vmatpush1.msra.mxu0 0.0
        %550 = vmatprep.subr.mxu0 0.0
        %551 = vmatpush1.msra.mxu0 0.0
        %552 = vmatprep.subr.mxu0 0.0
        %553 = vmatpush1.msra.mxu0 0.0
        %554 = vmatprep.subr.mxu0 0.0
        %555 = vmatpush1.msra.mxu0 0.0
        %556 = vmatprep.subr.mxu0 0.0
        %557 = vmatpush1.msra.mxu0 0.0
        %558 = vmatprep.subr.mxu0 0.0
        %559 = vmatpush1.msra.mxu0 0.0
        %560 = vmatprep.subr.mxu0 0.0
        %561 = vmatpush1.msra.mxu0 0.0
        %562 = vmatprep.subr.mxu0 0.0
        %563 = vmatpush1.msra.mxu0 0.0
        %564 = vmatprep.subr.mxu0 0.0
        %565 = vmatpush1.msra.mxu0 0.0
        %566 = vmatprep.subr.mxu0 0.0
        %567 = vmatpush1.msra.mxu0 0.0
        %568 = vmatprep.subr.mxu0 0.0
        %569 = vmatpush1.msra.mxu0 0.0
        %570 = vmatprep.subr.mxu0 0.0
        %571 = vmatpush1.msra.mxu0 0.0
        %572 = vmatprep.subr.mxu0 0.0
        %573 = vmatpush1.msra.mxu0 0.0
        %574 = vmatprep.subr.mxu0 0.0
        %575 = vmatpush1.msra.mxu0 0.0
        %576 = vmatprep.subr.mxu0 0.0
        %577 = vmatpush1.msra.mxu0 0.0
        %578 = vmatprep.mubr.f32.mxu0 0.0
        %579 = vmatmul.mubr.f32.gmra.mrb[0].mxu0 %v506
        %v580 = vpop.f32.mrb[0].mxu0
        %v581 = vadd.f32 0.0, %v580
        %v582 = vpop.f32.mrb[0].mxu0
        %v583 = vadd.f32 0.0, %v582
        %584 = vdwg.mxu0
        %v585 = vld [vmem:[%s4] sm:$0xf]
        %v586 = vld [vmem:[%s5] sm:$0xf]
        %v587 = vsel %vm322, %v581, 0.0
        %v588 = vsel %vm322, %v583, 0.0
        %v589 = vadd.f32 %v587, %v588
        %590 = vadd.xlane.f32.xlu0 %v589
        %v591 = vpop.xlane.xlu0 %590
        %v592 = vmul.f32 %v591, 0.00390625
        %v593 = vsub.f32 %v581, %v592
        %v594 = vsub.f32 %v583, %v592
        %v595 = vmul.f32 %v593, %v593
        %v596 = vmul.f32 %v594, %v594
        %v597 = vsel %vm322, %v595, 0.0
        %v598 = vsel %vm322, %v596, 0.0
        %v599 = vadd.f32 %v597, %v598
        %600 = vadd.xlane.f32.xlu0 %v599
        %v601 = vpop.xlane.xlu0 %600
        %v602 = vmul.f32 %v601, 0.00390625
        %v603 = vadd.f32 %v602, 1e-05
        %v604 = vrsqrt.pop %v603
        %v605 = vmul.f32 %v593, %v604
        %v606 = vmul.f32 %v594, %v604
        %608 = vset.pattern.permute.xlu0 0
        %609 = vperm.xlu0 %608, %v585
        %v610 = vpop.permute.xlu0 %609
        %v612 = vmul.f32 %v605, %v610
        %v613 = vmul.f32 %v606, %v610
        %615 = vset.pattern.permute.xlu0 0
        %616 = vperm.xlu0 %615, %v586
        %v617 = vpop.permute.xlu0 %616
        %v619 = vadd.f32 %v612, %v617
        %v620 = vadd.f32 %v613, %v617
        %v621 = vmax.f32 %v619, 0.0
        %v622 = vmax.f32 %v620, 0.0
        %625 = vrot.lane.b32.xlu0 %v621, 17
        %v626 = vpop.permute.xlu0 %625
        %627 = vrot.lane.b32.xlu0 %v622, 17
        %v628 = vpop.permute.xlu0 %627
        %v629 = vsel %vm394, %v626, %v628
        %v632 = vsel %vm394, 0.0, %v626
        %v633 = vmul.f32 %v632, %v308
        %v634 = vmul.f32 %v629, %v309
        %635 = vrot.lane.b32.xlu0 %v621, 16
        %v636 = vpop.permute.xlu0 %635
        %637 = vrot.lane.b32.xlu0 %v622, 16
        %v638 = vpop.permute.xlu0 %637
        %v639 = vsel %vm405, %v636, %v638
        %v641 = vsel %vm405, 0.0, %v636
        %642 = vrot.lane.b32.xlu0 %v621, 15
        %v643 = vpop.permute.xlu0 %642
        %644 = vrot.lane.b32.xlu0 %v622, 15
        %v645 = vpop.permute.xlu0 %644
        %v646 = vsel %vm413, %v643, %v645
        %v649 = vsel %vm413, 0.0, %v643
        %v650 = vmul.f32 %v649, %v314
        %v651 = vmul.f32 %v646, %v315
        %652 = vrot.lane.b32.xlu0 %v621, 1
        %v653 = vpop.permute.xlu0 %652
        %654 = vrot.lane.b32.xlu0 %v622, 1
        %v655 = vpop.permute.xlu0 %654
        %v656 = vsel %vm424, %v653, %v655
        %v659 = vsel %vm424, 0.0, %v653
        %v660 = vmul.f32 %v659, %v308
        %v661 = vmul.f32 %v656, %v309
        %662 = vrot.lane.b32.xlu0 %v621, 127
        %v663 = vpop.permute.xlu0 %662
        %664 = vrot.lane.b32.xlu0 %v622, 127
        %v665 = vpop.permute.xlu0 %664
        %v666 = vsel %vm435, %v663, %v665
        %v669 = vsel %vm435, %v665, 0.0
        %v670 = vmul.f32 %v666, %v314
        %v671 = vmul.f32 %v669, %v315
        %672 = vrot.lane.b32.xlu0 %v621, 113
        %v673 = vpop.permute.xlu0 %672
        %674 = vrot.lane.b32.xlu0 %v622, 113
        %v675 = vpop.permute.xlu0 %674
        %v676 = vsel %vm446, %v673, %v675
        %v679 = vsel %vm446, %v675, 0.0
        %v680 = vmul.f32 %v676, %v308
        %v681 = vmul.f32 %v679, %v309
        %682 = vrot.lane.b32.xlu0 %v621, 112
        %v683 = vpop.permute.xlu0 %682
        %684 = vrot.lane.b32.xlu0 %v622, 112
        %v685 = vpop.permute.xlu0 %684
        %v686 = vsel %vm457, %v683, %v685
        %v688 = vsel %vm457, %v685, 0.0
        %689 = vrot.lane.b32.xlu0 %v621, 111
        %v690 = vpop.permute.xlu0 %689
        %691 = vrot.lane.b32.xlu0 %v622, 111
        %v692 = vpop.permute.xlu0 %691
        %v693 = vsel %vm465, %v690, %v692
        %v696 = vsel %vm465, %v692, 0.0
        %v697 = vmul.f32 %v693, %v314
        %v698 = vmul.f32 %v696, %v315
        %v700 = vrot.slane %v641, 4
        %v701 = vrot.slane %v639, 4
        %v706 = vrot.slane %v660, 4
        %v707 = vrot.slane %v661, 4
        %v712 = vrot.slane %v670, 4
        %v713 = vrot.slane %v671, 4
        %v717 = vrot.slane %v686, 4
        %v718 = vrot.slane %v688, 4
        %v721 = vsel %vm322, %v633, %v700
        %v722 = vsel %vm322, %v634, %v701
        %v723 = vsel %vm322, %v650, %v706
        %v724 = vsel %vm322, %v651, %v707
        %v725 = vsel %vm322, %v621, %v712
        %v726 = vsel %vm322, %v622, %v713
        %v727 = vsel %vm322, %v680, %v717
        %v728 = vsel %vm322, %v681, %v718
        %v729 = vld [vmem:[%s6] sm:$0xf]
        %v731 = vsel %vm504, %v729, 0
        %v734 = vsel %vm322, %v697, 0
        %v737 = vsel %vm322, %v698, 0
        %739 = vmatprep.subr.mxu0 %v722
        %740 = vmatpush1.msra.mxu0 %v721
        %741 = vmatprep.subr.mxu0 %v724
        %742 = vmatpush1.msra.mxu0 %v723
        %743 = vmatprep.subr.mxu0 %v726
        %744 = vmatpush1.msra.mxu0 %v725
        %745 = vmatprep.subr.mxu0 %v728
        %746 = vmatpush1.msra.mxu0 %v727
        %747 = vmatprep.subr.mxu0 %v737
        %748 = vmatpush1.msra.mxu0 %v734
        %749 = vmatprep.subr.mxu0 0.0
        %750 = vmatpush1.msra.mxu0 0.0
        %751 = vmatprep.subr.mxu0 0.0
        %752 = vmatpush1.msra.mxu0 0.0
        %753 = vmatprep.subr.mxu0 0.0
        %754 = vmatpush1.msra.mxu0 0.0
        %755 = vmatprep.subr.mxu0 0.0
        %756 = vmatpush1.msra.mxu0 0.0
        %757 = vmatprep.subr.mxu0 0.0
        %758 = vmatpush1.msra.mxu0 0.0
        %759 = vmatprep.subr.mxu0 0.0
        %760 = vmatpush1.msra.mxu0 0.0
        %761 = vmatprep.subr.mxu0 0.0
        %762 = vmatpush1.msra.mxu0 0.0
        %763 = vmatprep.subr.mxu0 0.0
        %764 = vmatpush1.msra.mxu0 0.0
        %765 = vmatprep.subr.mxu0 0.0
        %766 = vmatpush1.msra.mxu0 0.0
        %767 = vmatprep.subr.mxu0 0.0
        %768 = vmatpush1.msra.mxu0 0.0
        %769 = vmatprep.subr.mxu0 0.0
        %770 = vmatpush1.msra.mxu0 0.0
        %771 = vmatprep.subr.mxu0 0.0
        %772 = vmatpush1.msra.mxu0 0.0
        %773 = vmatprep.subr.mxu0 0.0
        %774 = vmatpush1.msra.mxu0 0.0
        %775 = vmatprep.subr.mxu0 0.0
        %776 = vmatpush1.msra.mxu0 0.0
        %777 = vmatprep.subr.mxu0 0.0
        %778 = vmatpush1.msra.mxu0 0.0
        %779 = vmatprep.subr.mxu0 0.0
        %780 = vmatpush1.msra.mxu0 0.0
        %781 = vmatprep.subr.mxu0 0.0
        %782 = vmatpush1.msra.mxu0 0.0
        %783 = vmatprep.subr.mxu0 0.0
        %784 = vmatpush1.msra.mxu0 0.0
        %785 = vmatprep.subr.mxu0 0.0
        %786 = vmatpush1.msra.mxu0 0.0
        %787 = vmatprep.subr.mxu0 0.0
        %788 = vmatpush1.msra.mxu0 0.0
        %789 = vmatprep.subr.mxu0 0.0
        %790 = vmatpush1.msra.mxu0 0.0
        %791 = vmatprep.subr.mxu0 0.0
        %792 = vmatpush1.msra.mxu0 0.0
        %793 = vmatprep.subr.mxu0 0.0
        %794 = vmatpush1.msra.mxu0 0.0
        %795 = vmatprep.subr.mxu0 0.0
        %796 = vmatpush1.msra.mxu0 0.0
        %797 = vmatprep.subr.mxu0 0.0
        %798 = vmatpush1.msra.mxu0 0.0
        %799 = vmatprep.subr.mxu0 0.0
        %800 = vmatpush1.msra.mxu0 0.0
        %801 = vmatprep.subr.mxu0 0.0
        %802 = vmatpush1.msra.mxu0 0.0
        %803 = vmatprep.mubr.f32.mxu0 0.0
        %804 = vmatmul.mubr.f32.gmra.mrb[0].mxu0 %v731
        %v805 = vpop.f32.mrb[0].mxu0
        %v806 = vadd.f32 %v316, %v805
        %v807 = vpop.f32.mrb[0].mxu0
        %v808 = vadd.f32 %v320, %v807
        %809 = vdwg.mxu0
        %v812 = vcombine.low %v806, %v808
        %814 = vst [vmem:[%s271] sm:$0xff] %v812
        %s815 = sand.u32 %s181, 1
        %s816 = scalar_lea.sflag [#allocation3], %s815
        %s817 = sand.u32 %s181, 1
        %s818 = smul.addr %s817, 8
        %s819 = scalar_lea.vmem [#allocation2], %s818
        // Predicated region
        $region49: #{tpu_custom_call.1} parent=47 // pred_check
          %p820 = pneg %p191
        $region50: #{tpu_custom_call.1} parent=47 // pred_check_branch
          %822 = sbr.rel (%p820) target = $region52
        $region51: #{tpu_custom_call.1} parent=47 // pred_region
          %s824 = ssub.s32 128, 128
          %825 = vsyncadd %s816, %s824
          %s826 = smul.addr %s21, 2
          %s827 = smul.addr %s826, 64
          %s828 = scalar_lea.hbm %s7, %s827
          %s830 = sshll.u32 %s819, 4
          %s831 = int_to_ptr.vmem [resolvable:$true] %s830
          %833 = dma.vmem_to_hbm [thread:$0]  %s831, 128, %s828, %s816
        $region52: #{tpu_custom_call.1} parent=47 // pred_fallthru
          _
      $region48: #{tpu_custom_call.1} parent=5 // pred_fallthru
        _
      %p834 = scmp.le.s32.totalorder 2, %s16
      // Predicated region
      $region53: #{tpu_custom_call.1} parent=5 // pred_check
        %p835 = pneg %p834
      $region54: #{tpu_custom_call.1} parent=5 // pred_check_branch
        %837 = sbr.rel (%p835) target = $region56
      $region55: #{tpu_custom_call.1} parent=5 // pred_region
        %s838 = ssub.s32 %s16, 2
        // Predicated region
        $region57: #{tpu_custom_call.1} parent=55 // pred_check
          %p839 = pneg %p197
        $region58: #{tpu_custom_call.1} parent=55 // pred_check_branch
          %841 = sbr.rel (%p839) target = $region60
        $region59: #{tpu_custom_call.1} parent=55 // pred_region
          %s842 = sand.u32 %s182, 1
          %s843 = scalar_lea.sflag [#allocation3], %s842
          %s844 = sand.u32 %s182, 1
          %s845 = smul.addr %s844, 8
          %s846 = scalar_lea.vmem [#allocation2], %s845
          %847 = dma.done %s843, 128
        $region60: #{tpu_custom_call.1} parent=55 // pred_fallthru
          _
      $region56: #{tpu_custom_call.1} parent=5 // pred_fallthru
        _
    $region6: #{tpu_custom_call.1} parent=1 // loop_footer
      %s20 = sadd.s32 1, %s16
    $region7: #{tpu_custom_call.1} parent=1 // loop_footer_branch
      %15 = sbr.rel target = $region3
    $region8: #{tpu_custom_call.1} parent=1 // loop_exit
      _
    %848 = vsyncpa [#allocation3], 1
    %s849 = scalar_lea.sflag [#allocation3], 1
    %850 = vsyncpa %s849, 1

</llo_original>
